<compile_context>
chip_gen: v7x
topology: tpu7x:2x2x1
jax: 0.10.0
libtpu: 0.0.40
codegen_flags: <defaults>
</compile_context>

<pallas_src>
import jax
import jax.numpy as jnp
from jax.experimental import pallas as pl
from jax.experimental.pallas import tpu as pltpu  # noqa: F401  (TPU backend)


def _linear_t_kernel(x_ref, wb_ref, o_ref):
    """y^T = (x @ W^T + b)^T, computed entirely on the VPU.

    x_ref:  (M, K)        flattened input rows
    wb_ref: (K + 1, F_out) == [W^T ; b]  (weight pre-transposed, bias folded in)
    o_ref:  (F_out, M)    output, already transposed (fuses torch transpose(0,2))
    """
    x = x_ref[...]
    wb = wb_ref[...]
    K = x.shape[1]

    # Start from the bias row; it broadcasts over M.
    acc = wb[K:K + 1, :]                      # (1, F_out)
    # K is tiny (2): unrolled broadcast multiply-adds instead of an MXU matmul.
    for k in range(K):
        acc = acc + x[:, k:k + 1] * wb[k:k + 1, :]   # (M, F_out)

    # Single tiny vreg shuffle: write the transposed result directly.
    o_ref[...] = acc.T.astype(o_ref.dtype)


def pallas_linear_t(x2d, weight, bias):
    """Returns (x2d @ weight.T + bias).T as a (F_out, M) array via one Pallas call.

    x2d:    (M, K) float32
    weight: (F_out, K) float32   (PyTorch nn.Linear convention)
    bias:   (F_out,) float32
    """
    M, K = x2d.shape
    F_out = weight.shape[0]

    # Fold W^T and bias into a single operand -> one fewer input DMA.
    wb = jnp.concatenate([weight.T, bias.reshape(1, F_out)], axis=0)  # (K+1, F_out)

    return pl.pallas_call(
        _linear_t_kernel,
        out_shape=jax.ShapeDtypeStruct((F_out, M), jnp.float32),
        # Whole arrays == full blocks (legal because block shape equals array
        # shape); everything fits trivially in VMEM, no grid needed.
        in_specs=[
            pl.BlockSpec((M, K), lambda: (0, 0)),
            pl.BlockSpec((K + 1, F_out), lambda: (0, 0)),
        ],
        out_specs=pl.BlockSpec((F_out, M), lambda: (0, 0)),
        cost_estimate=pl.CostEstimate(
            flops=2 * M * K * F_out,
            transcendentals=0,
            bytes_accessed=4 * (M * K + (K + 1) * F_out + F_out * M),
        ),
    )(x2d, wb)


def model_forward(x1, weight, bias):
    """Reproduces Model.forward semantics.

    x1: (B, S, F_in) -> linear -> (B, S, F_out) -> transpose(0, 2) -> (F_out, S, B)
    """
    B, S, F_in = x1.shape
    F_out = weight.shape[0]

    x2d = x1.reshape(B * S, F_in)
    y_t = pallas_linear_t(x2d, weight, bias)          # (F_out, B*S), pre-transposed
    # For B == 1 (the module's shape) this transpose is a pure metadata reshape.
    v2 = jnp.transpose(y_t.reshape(F_out, B, S), (0, 2, 1))   # (F_out, S, B)
    return v2


if __name__ == "__main__":
    key = jax.random.PRNGKey(0)
    k_x, k_w, k_b = jax.random.split(key, 3)

    # Input matching the module: x1 = torch.randn(1, 2, 2)
    x1 = jax.random.normal(k_x, (1, 2, 2), dtype=jnp.float32)

    # Deterministic param init mimicking nn.Linear(2, 2) default
    # (uniform in [-1/sqrt(in_features), 1/sqrt(in_features)]).
    in_features, out_features = 2, 2
    bound = 1.0 / (in_features ** 0.5)
    weight = jax.random.uniform(
        k_w, (out_features, in_features), dtype=jnp.float32,
        minval=-bound, maxval=bound)
    bias = jax.random.uniform(
        k_b, (out_features,), dtype=jnp.float32, minval=-bound, maxval=bound)

    out = jax.block_until_ready(model_forward(x1, weight, bias))

    # Sanity check against pure-JAX reference.
    ref = jnp.transpose(x1 @ weight.T + bias, (2, 1, 0))
    assert out.shape == (2, 2, 1), out.shape
    assert jnp.allclose(out, ref, atol=1e-5, rtol=1e-5)

    print("KERNEL_OK")
</pallas_src>

<mosaic_0001>
module attributes {stable_mosaic.version = 11 : i64} {
  func.func @_linear_t_kernel(%arg0: memref<2x2xf32, #tpu.memory_space<vmem>>, %arg1: memref<3x2xf32, #tpu.memory_space<vmem>>, %arg2: memref<2x2xf32, #tpu.memory_space<vmem>>) attributes {dimension_semantics = [], scalar_prefetch = 0 : i64, scratch_operands = 0 : i64, tpu.core_type = #tpu.core_type<tc>} {
    %c0 = arith.constant 0 : index
    %c0_0 = arith.constant 0 : index
    %0 = vector.load %arg0[%c0, %c0_0] : memref<2x2xf32, #tpu.memory_space<vmem>>, vector<2x2xf32>
    %c0_1 = arith.constant 0 : index
    %c0_2 = arith.constant 0 : index
    %1 = vector.load %arg1[%c0_1, %c0_2] : memref<3x2xf32, #tpu.memory_space<vmem>>, vector<3x2xf32>
    %2 = vector.extract_strided_slice %1 {offsets = [2, 0], sizes = [1, 2], strides = [1, 1]} : vector<3x2xf32> to vector<1x2xf32>
    %3 = vector.extract_strided_slice %0 {offsets = [0, 0], sizes = [2, 1], strides = [1, 1]} : vector<2x2xf32> to vector<2x1xf32>
    %4 = vector.extract_strided_slice %1 {offsets = [0, 0], sizes = [1, 2], strides = [1, 1]} : vector<3x2xf32> to vector<1x2xf32>
    %5 = vector.broadcast %3 : vector<2x1xf32> to vector<2x2xf32>
    %6 = vector.broadcast %4 : vector<1x2xf32> to vector<2x2xf32>
    %7 = arith.mulf %5, %6 : vector<2x2xf32>
    %8 = vector.broadcast %2 : vector<1x2xf32> to vector<2x2xf32>
    %9 = arith.addf %8, %7 : vector<2x2xf32>
    %10 = vector.extract_strided_slice %0 {offsets = [0, 1], sizes = [2, 1], strides = [1, 1]} : vector<2x2xf32> to vector<2x1xf32>
    %11 = vector.extract_strided_slice %1 {offsets = [1, 0], sizes = [1, 2], strides = [1, 1]} : vector<3x2xf32> to vector<1x2xf32>
    %12 = vector.broadcast %10 : vector<2x1xf32> to vector<2x2xf32>
    %13 = vector.broadcast %11 : vector<1x2xf32> to vector<2x2xf32>
    %14 = arith.mulf %12, %13 : vector<2x2xf32>
    %15 = arith.addf %9, %14 : vector<2x2xf32>
    %16 = tpu.transpose %15, [1, 0] : vector<2x2xf32> -> vector<2x2xf32>
    %c0_3 = arith.constant 0 : index
    %c0_4 = arith.constant 0 : index
    %17 = vector.load %arg2[%c0_3, %c0_4] : memref<2x2xf32, #tpu.memory_space<vmem>>, vector<2x2xf32>
    tpu.vector_store %arg2[%c0_3, %c0_4], %16 {strides = array<i32>} : memref<2x2xf32, #tpu.memory_space<vmem>>, vector<2x2xf32>,
    return
  }
}

</mosaic_0001>

<llo_original>
// kernel: tpu_custom_call.1
$region0: #{tpu_custom_call.1}
  #allocation0 [shape = 'u32[]', space=smem, size = 0x4, offset = 0x4, fixed_abs, tag = 'smem constant byte address 0x4 - core index']
  #allocation1 [shape = 'u32[144,128]{1,0:T(1,128)}', space=vmem, size = 0x12000, scoped, tag = 'internal scratch']
  %s0 = inlined_call_operand.vmem [shape: f32[2,2], index: 0, kind: input, shape index: {}]
  %s1 = inlined_call_operand.vmem [shape: f32[3,2], index: 1, kind: input, shape index: {}]
  %s2 = inlined_call_operand.hbm [shape: f32[2,2], index: 2, kind: output, shape index: {}]
  %s3 = sld [smem:[#allocation0]]
  $region18: #{tpu_custom_call.1} parent=0
    _
  %s5 = ssub.s32 1, %s3
  %s6 = scalar_select 0, %s5, %s3
  $region1: #{tpu_custom_call.1} parent=0
    #allocation2 [shape = 'u8[1024]{0}', space=vmem, size = 0x400, scoped, tag = 'output window, operand 0, single buffered']
    #allocation3 [shape = 's32[1]{0}', space=sflag, size = 0x4, scoped, tag = 'scoped memory for tpu_custom_call.1']
    %7 = vsyncpa [#allocation3], 0
    // Predicated region
    $region2: #{tpu_custom_call.1} parent=1 // pred_check
      _
    $region3: #{tpu_custom_call.1} parent=1 // pred_check_branch
      %9 = sbr.rel (0) target = $region5
    $region4: #{tpu_custom_call.1} parent=1 // pred_region
      _
    $region5: #{tpu_custom_call.1} parent=1 // pred_fallthru
      _
    // Predicated region
    $region6: #{tpu_custom_call.1} parent=1 // pred_check
      _
    $region7: #{tpu_custom_call.1} parent=1 // pred_check_branch
      %11 = sbr.rel (0) target = $region9
    $region8: #{tpu_custom_call.1} parent=1 // pred_region
      _
    $region9: #{tpu_custom_call.1} parent=1 // pred_fallthru
      _
    %v12 = vld [vmem:[%s0] sm:$0x3]
    %v13 = vld [vmem:[%s1] sm:$0x7]
    %15 = vset.pattern.permute.xlu0 0
    %16 = vperm.xlu0 %15, %v12
    %v17 = vpop.permute.xlu0 %16
    %v19 = vlaneseq
    %v20 = vshrl.u32 %v19, 7
    %v21 = vsub.s32 0, %v20
    %v22 = vrot.slane %v13, %v21
    %v23 = vmul.f32 %v17, %v22
    %v24 = vlaneseq
    %v25 = vshrl.u32 %v24, 7
    %v26 = vsub.s32 2, %v25
    %v27 = vrot.slane %v13, %v26
    %v28 = vadd.f32 %v27, %v23
    %29 = vset.pattern.permute.xlu0 1
    %30 = vperm.xlu0 %29, %v12
    %v31 = vpop.permute.xlu0 %30
    %v33 = vlaneseq
    %v34 = vshrl.u32 %v33, 7
    %v35 = vsub.s32 1, %v34
    %v36 = vrot.slane %v13, %v35
    %v37 = vmul.f32 %v31, %v36
    %v38 = vadd.f32 %v28, %v37
    %39 = vxpose.xlu0.b32.start [1/16] %v38, 128
    %40 = vxpose.xlu0.b32.cont [2/16] 0.0, 128
    %41 = vxpose.xlu0.b32.cont [3/16] 0.0, 128
    %42 = vxpose.xlu0.b32.cont [4/16] 0.0, 128
    %43 = vxpose.xlu0.b32.cont [5/16] 0.0, 128
    %44 = vxpose.xlu0.b32.cont [6/16] 0.0, 128
    %45 = vxpose.xlu0.b32.cont [7/16] 0.0, 128
    %46 = vxpose.xlu0.b32.cont [8/16] 0.0, 128
    %47 = vxpose.xlu0.b32.cont [9/16] 0.0, 128
    %48 = vxpose.xlu0.b32.cont [10/16] 0.0, 128
    %49 = vxpose.xlu0.b32.cont [11/16] 0.0, 128
    %50 = vxpose.xlu0.b32.cont [12/16] 0.0, 128
    %51 = vxpose.xlu0.b32.cont [13/16] 0.0, 128
    %52 = vxpose.xlu0.b32.cont [14/16] 0.0, 128
    %53 = vxpose.xlu0.b32.cont [15/16] 0.0, 128
    %54 = vxpose.xlu0.b32.end [16/16] 0.0, 128
    %v55 = vpop.trf.xlu0
    %v56 = vpop.trf.xlu0
    %v57 = vpop.trf.xlu0
    %v58 = vpop.trf.xlu0
    %v59 = vpop.trf.xlu0
    %v60 = vpop.trf.xlu0
    %v61 = vpop.trf.xlu0
    %v62 = vpop.trf.xlu0
    %v63 = vpop.trf.xlu0
    %v64 = vpop.trf.xlu0
    %v65 = vpop.trf.xlu0
    %v66 = vpop.trf.xlu0
    %v67 = vpop.trf.xlu0
    %v68 = vpop.trf.xlu0
    %v69 = vpop.trf.xlu0
    %v70 = vpop.trf.xlu0
    %vm71 = vcmask 9216
    %72 = vst.msk [vmem:[#allocation2] sm:$0x3] %vm71, %v55
    // Predicated region
    $region10: #{tpu_custom_call.1} parent=1 // pred_check
      _
    $region11: #{tpu_custom_call.1} parent=1 // pred_check_branch
      %74 = sbr.rel (0) target = $region13
    $region12: #{tpu_custom_call.1} parent=1 // pred_region
      %s76 = ssub.s32 32, 32
      %77 = vsyncadd [#allocation3], %s76
      %s79 = sshll.u32 [#allocation2], 4
      %s80 = int_to_ptr.vmem [resolvable:$true] %s79
      %82 = dma.vmem_to_hbm [thread:$0]  %s80, 32, %s2, [#allocation3]
    $region13: #{tpu_custom_call.1} parent=1 // pred_fallthru
      _
    // Predicated region
    $region14: #{tpu_custom_call.1} parent=1 // pred_check
      _
    $region15: #{tpu_custom_call.1} parent=1 // pred_check_branch
      %84 = sbr.rel (0) target = $region17
    $region16: #{tpu_custom_call.1} parent=1 // pred_region
      %85 = dma.done [#allocation3], 32
    $region17: #{tpu_custom_call.1} parent=1 // pred_fallthru
      _
    %86 = vsyncpa [#allocation3], 1

</llo_original>
